<compile_context>
chip_gen: v5e
topology: v5e:2x2
jax: 0.10.0
libtpu: 0.0.40
codegen_flags: <defaults>
</compile_context>

<pallas_src>
import functools

import jax
import jax.numpy as jnp
from jax import lax
from jax.experimental import pallas as pl
from jax.experimental.pallas import tpu as pltpu


def _cdiv(a, b):
    return (a + b - 1) // b


def _round_up(v, m):
    return _cdiv(v, m) * m


def _smooth_bce_kernel(x_ref, tgt_ref, out_ref, acc_ref, *,
                       smoothing, target_threshold, num_classes,
                       valid_rows, padded_rows, tile_b, k_per_chunk):
    p = pl.program_id(0)            # parallel chunk (megacore on v7x)
    k = pl.program_id(1)            # reduction step within the chunk
    nk = pl.num_programs(1)

    # Zero the resident accumulator at the start of each chunk's reduction.
    @pl.when(k == 0)
    def _():
        acc_ref[...] = jnp.zeros_like(acc_ref)

    x = x_ref[...].astype(jnp.float32)      # (TILE_B, C) -> f32 compute
    t_idx = tgt_ref[...]                    # (TILE_B, 1) int32

    # Label-smoothing constants folded at trace time; threshold folded too.
    if num_classes > 1:
        off_value = smoothing / num_classes
    else:
        off_value = smoothing / 2.0
    on_value = 1.0 - smoothing + off_value
    if target_threshold is not None:
        on_value = float(on_value > target_threshold)
        off_value = float(off_value > target_threshold)

    if num_classes > 1:
        col = lax.broadcasted_iota(jnp.int32, x.shape, 1)
        target = jnp.where(col == t_idx,
                           jnp.float32(on_value), jnp.float32(off_value))
    else:  # num_classes == 1: targets are dense 0/1 labels
        target = jnp.where(t_idx != 0,
                           jnp.float32(on_value), jnp.float32(off_value))

    # Numerically-stable BCE with logits (weight=None, pos_weight=None):
    #   loss = max(x, 0) - x*t + log(1 + exp(-|x|))
    loss = jnp.maximum(x, 0.0) - x * target + jnp.log1p(jnp.exp(-jnp.abs(x)))

    if padded_rows != valid_rows:
        # Mask rows introduced by padding so they contribute exactly zero.
        tile_idx = p * k_per_chunk + k
        row = lax.broadcasted_iota(jnp.int32, loss.shape, 0) + tile_idx * tile_b
        loss = jnp.where(row < valid_rows, loss, 0.0)

    # Steady state: pure VPU accumulate (no XLU, no lane-sparse stores).
    acc_ref[...] += loss

    # Finalize once per chunk: one cross-lane reduction + lane-dense store.
    @pl.when(k == nk - 1)
    def _():
        out_ref[...] = jnp.full_like(out_ref, jnp.sum(acc_ref[...]))


def _choose_tile_b(B, C, itemsize):
    # ~2 MiB per x buffer: 2x double-buffered input + f32 accumulator scratch
    # stays well under v5e's 16 MiB default scoped VMEM and v7x's 64 MiB.
    target_rows = (2 * 1024 * 1024) // max(C * itemsize, 1)
    tile = min(max(target_rows, 8), _round_up(B, 8))
    return max(8, (tile // 8) * 8)


def smooth_bce_with_logits_loss(x, target, *, smoothing=0.1,
                                target_threshold=None, reduction="mean",
                                tile_b=None, num_parallel_chunks=2):
    """JAX/Pallas equivalent of SmoothBCEWithLogitsLoss.forward.

    x:      (B, C) float logits (f32 or bf16; bf16 halves the HBM traffic)
    target: (B,) integer dense class indices (or 0/1 labels when C == 1)
    """
    assert x.ndim == 2
    assert x.shape[0] == target.shape[0]
    assert 0.0 <= smoothing < 1.0
    assert reduction in ("mean", "sum", "batch_mean")
    # TODO(synk): reduction='none' (elementwise output) and the optional
    # weight / pos_weight tensors of BCEWithLogitsLoss are not wired in here.
    # TODO(synk): for very large C (>~4096) the class axis should be tiled too.

    B, C = x.shape
    tgt = target.astype(jnp.int32).reshape(B, 1)

    if tile_b is None:
        tile_b = _choose_tile_b(B, C, jnp.dtype(x.dtype).itemsize)
    tile_b = max(8, (tile_b // 8) * 8)

    num_tiles = _cdiv(B, tile_b)
    P = num_parallel_chunks if num_tiles >= num_parallel_chunks else 1
    k_per_chunk = _cdiv(num_tiles, P)
    padded_B = P * k_per_chunk * tile_b

    if padded_B != B:
        x = jnp.pad(x, ((0, padded_B - B), (0, 0)))
        tgt = jnp.pad(tgt, ((0, padded_B - B), (0, 0)))

    kernel = functools.partial(
        _smooth_bce_kernel,
        smoothing=float(smoothing), target_threshold=target_threshold,
        num_classes=C, valid_rows=B, padded_rows=padded_B,
        tile_b=tile_b, k_per_chunk=k_per_chunk)

    partials = pl.pallas_call(
        kernel,
        out_shape=jax.ShapeDtypeStruct((P * 8, 128), jnp.float32),
        grid_spec=pltpu.PrefetchScalarGridSpec(
            num_scalar_prefetch=0,
            grid=(P, k_per_chunk),
            in_specs=[
                pl.BlockSpec((tile_b, C), lambda p, k: (p * k_per_chunk + k, 0)),
                pl.BlockSpec((tile_b, 1), lambda p, k: (p * k_per_chunk + k, 0)),
            ],
            out_specs=pl.BlockSpec((8, 128), lambda p, k: (p, 0)),
            scratch_shapes=[pltpu.VMEM((tile_b, C), jnp.float32)],
        ),
        compiler_params=pltpu.CompilerParams(
            dimension_semantics=("parallel", "arbitrary")),
    )(x, tgt)

    # One scalar per chunk lives at element [p*8, 0] of its (8,128) block.
    loss_sum = jnp.sum(partials[::8, 0])

    if reduction == "sum":
        return loss_sum
    if reduction == "batch_mean":
        return loss_sum / B
    return loss_sum / (B * C)   # 'mean'


def _reference(x, target, *, smoothing=0.1, target_threshold=None,
               reduction="mean"):
    x = x.astype(jnp.float32)
    B, C = x.shape
    if C > 1:
        off = smoothing / C
        on = 1.0 - smoothing + off
        t = jnp.full((B, C), off, dtype=jnp.float32)
        t = t.at[jnp.arange(B), target.astype(jnp.int32)].set(on)
    else:
        off = smoothing / 2.0
        on = 1.0 - smoothing + off
        t = jnp.where(target.astype(bool), on, off).reshape(-1, 1)
        t = t.astype(jnp.float32)
    if target_threshold is not None:
        t = (t > target_threshold).astype(jnp.float32)
    loss = jnp.maximum(x, 0.0) - x * t + jnp.log1p(jnp.exp(-jnp.abs(x)))
    if reduction == "sum":
        return jnp.sum(loss)
    if reduction == "batch_mean":
        return jnp.sum(loss) / B
    return jnp.mean(loss)


if __name__ == "__main__":
    key = jax.random.PRNGKey(0)
    kx, kt, kx2, kt2 = jax.random.split(key, 4)

    # Small classification-head shape: batch=8, classes=16.
    B, C = 8, 16
    x = jax.random.normal(kx, (B, C), dtype=jnp.float32)
    target = jax.random.randint(kt, (B,), 0, C, dtype=jnp.int32)

    out = smooth_bce_with_logits_loss(x, target, smoothing=0.1,
                                      reduction="mean")
    out = jax.block_until_ready(out)
    ref = _reference(x, target, smoothing=0.1, reduction="mean")
    assert jnp.allclose(out, ref, rtol=1e-5, atol=1e-5), (out, ref)

    # Exercise multi-tile reduction, megacore chunking, remainder masking,
    # target thresholding, and all scalar reductions.
    B2, C2 = 200, 16
    x2 = jax.random.normal(kx2, (B2, C2), dtype=jnp.float32)
    target2 = jax.random.randint(kt2, (B2,), 0, C2, dtype=jnp.int32)
    for red in ("mean", "sum", "batch_mean"):
        out2 = smooth_bce_with_logits_loss(
            x2, target2, smoothing=0.1, target_threshold=0.2,
            reduction=red, tile_b=64)
        out2 = jax.block_until_ready(out2)
        ref2 = _reference(x2, target2, smoothing=0.1, target_threshold=0.2,
                          reduction=red)
        assert jnp.allclose(out2, ref2, rtol=1e-5, atol=1e-5), (red, out2, ref2)

    print("KERNEL_OK")
</pallas_src>

<mosaic_0001>
module attributes {stable_mosaic.version = 11 : i64} {
  func.func @_smooth_bce_kernel(%arg0: i32, %arg1: i32, %arg2: memref<8x16xf32, #tpu.memory_space<vmem>>, %arg3: memref<8x1xi32, #tpu.memory_space<vmem>>, %arg4: memref<8x128xf32, #tpu.memory_space<vmem>>, %arg5: memref<8x16xf32, #tpu.memory_space<vmem>>) attributes {dimension_semantics = [#tpu.dimension_semantics<parallel>, #tpu.dimension_semantics<arbitrary>], iteration_bounds = array<i64: 1, 1>, scalar_prefetch = 0 : i64, scratch_operands = 1 : i64, tpu.core_type = #tpu.core_type<tc>, window_params = [{transform_indices = @transform_0, window_bounds = array<i64: 8, 16>}, {transform_indices = @transform_1, window_bounds = array<i64: 8, 1>}, {transform_indices = @transform_2, window_bounds = array<i64: 8, 128>}]} {
    %c0_i32 = arith.constant 0 : i32
    %0 = arith.cmpi eq, %arg1, %c0_i32 : i32
    %1 = arith.extui %0 : i1 to i32
    %c0_i32_0 = arith.constant 0 : i32
    %2 = arith.cmpi ne, %1, %c0_i32_0 : i32
    scf.if %2 {
      %cst_13 = arith.constant 0.000000e+00 : f32
      %27 = vector.broadcast %cst_13 : f32 to vector<8x16xf32>
      %c0_14 = arith.constant 0 : index
      %c0_15 = arith.constant 0 : index
      %28 = vector.load %arg5[%c0_14, %c0_15] : memref<8x16xf32, #tpu.memory_space<vmem>>, vector<8x16xf32>
      tpu.vector_store %arg5[%c0_14, %c0_15], %27 {strides = array<i32>} : memref<8x16xf32, #tpu.memory_space<vmem>>, vector<8x16xf32>,
    } else {
    }
    %c0 = arith.constant 0 : index
    %c0_1 = arith.constant 0 : index
    %3 = vector.load %arg2[%c0, %c0_1] : memref<8x16xf32, #tpu.memory_space<vmem>>, vector<8x16xf32>
    %c0_2 = arith.constant 0 : index
    %c0_3 = arith.constant 0 : index
    %4 = vector.load %arg3[%c0_2, %c0_3] : memref<8x1xi32, #tpu.memory_space<vmem>>, vector<8x1xi32>
    %5 = tpu.iota {dimensions = array<i32: 1>} : vector<8x16xi32>
    %6 = vector.broadcast %4 : vector<8x1xi32> to vector<8x16xi32>
    %7 = arith.cmpi eq, %5, %6 : vector<8x16xi32>
    %cst = arith.constant 9.062500e-01 : f32
    %cst_4 = arith.constant 6.250000e-03 : f32
    %8 = vector.broadcast %cst : f32 to vector<8x16xf32>
    %9 = vector.broadcast %cst_4 : f32 to vector<8x16xf32>
    %10 = arith.select %7, %8, %9 : vector<8x16xi1>, vector<8x16xf32>
    %cst_5 = arith.constant 0.000000e+00 : f32
    %11 = vector.broadcast %cst_5 : f32 to vector<8x16xf32>
    %12 = arith.maximumf %3, %11 : vector<8x16xf32>
    %13 = arith.mulf %3, %10 : vector<8x16xf32>
    %14 = arith.subf %12, %13 : vector<8x16xf32>
    %15 = math.absf %3 : vector<8x16xf32>
    %cst_6 = arith.constant 0.000000e+00 : f32
    %16 = vector.broadcast %cst_6 : f32 to vector<8x16xf32>
    %17 = arith.subf %16, %15 : vector<8x16xf32>
    %18 = math.exp %17 : vector<8x16xf32>
    %19 = math.log1p %18 : vector<8x16xf32>
    %20 = arith.addf %14, %19 : vector<8x16xf32>
    %c0_7 = arith.constant 0 : index
    %c0_8 = arith.constant 0 : index
    %21 = vector.load %arg5[%c0_7, %c0_8] : memref<8x16xf32, #tpu.memory_space<vmem>>, vector<8x16xf32>
    %22 = arith.addf %21, %20 : vector<8x16xf32>
    %c0_9 = arith.constant 0 : index
    %c0_10 = arith.constant 0 : index
    %23 = vector.load %arg5[%c0_9, %c0_10] : memref<8x16xf32, #tpu.memory_space<vmem>>, vector<8x16xf32>
    tpu.vector_store %arg5[%c0_9, %c0_10], %22 {strides = array<i32>} : memref<8x16xf32, #tpu.memory_space<vmem>>, vector<8x16xf32>,
    %c0_i32_11 = arith.constant 0 : i32
    %24 = arith.cmpi eq, %arg1, %c0_i32_11 : i32
    %25 = arith.extui %24 : i1 to i32
    %c0_i32_12 = arith.constant 0 : i32
    %26 = arith.cmpi ne, %25, %c0_i32_12 : i32
    scf.if %26 {
      %c0_13 = arith.constant 0 : index
      %c0_14 = arith.constant 0 : index
      %27 = vector.load %arg5[%c0_13, %c0_14] : memref<8x16xf32, #tpu.memory_space<vmem>>, vector<8x16xf32>
      %28 = vector.shape_cast %27 : vector<8x16xf32> to vector<1x8x16xf32>
      %cst_15 = arith.constant dense<0.000000e+00> : vector<1xf32>
      %29 = vector.multi_reduction <add>, %28, %cst_15 [1, 2] : vector<1x8x16xf32> to vector<1xf32>
      %30 = vector.shape_cast %29 : vector<1xf32> to vector<1x1x1xf32>
      %31 = vector.extract %30[0, 0, 0] : f32 from vector<1x1x1xf32>
      %32 = vector.broadcast %31 : f32 to vector<8x128xf32>
      %c0_16 = arith.constant 0 : index
      %c0_17 = arith.constant 0 : index
      %33 = vector.load %arg4[%c0_16, %c0_17] : memref<8x128xf32, #tpu.memory_space<vmem>>, vector<8x128xf32>
      tpu.vector_store %arg4[%c0_16, %c0_17], %32 {strides = array<i32>} : memref<8x128xf32, #tpu.memory_space<vmem>>, vector<8x128xf32>,
    } else {
    }
    return
  }
  func.func @transform_0(%arg0: i32, %arg1: i32) -> (i32, i32) {
    %c1_i32 = arith.constant 1 : i32
    %0 = arith.muli %arg0, %c1_i32 : i32
    %1 = arith.addi %0, %arg1 : i32
    %c0_i32 = arith.constant 0 : i32
    %c0_i32_0 = arith.constant 0 : i32
    return %1, %c0_i32 : i32, i32
  }
  func.func @transform_1(%arg0: i32, %arg1: i32) -> (i32, i32) {
    %c1_i32 = arith.constant 1 : i32
    %0 = arith.muli %arg0, %c1_i32 : i32
    %1 = arith.addi %0, %arg1 : i32
    %c0_i32 = arith.constant 0 : i32
    %c0_i32_0 = arith.constant 0 : i32
    return %1, %c0_i32 : i32, i32
  }
  func.func @transform_2(%arg0: i32, %arg1: i32) -> (i32, i32) {
    %c0_i32 = arith.constant 0 : i32
    %c0_i32_0 = arith.constant 0 : i32
    return %arg0, %c0_i32 : i32, i32
  }
}

</mosaic_0001>

<llo_original>
// kernel: tpu_custom_call.1
$region0: #{tpu_custom_call.1}
  #allocation0 [shape = 'u32[]', space=smem, size = 0x4, offset = 0x4, fixed_abs, tag = 'smem constant byte address 0x4 - core index']
  #allocation1 [shape = 'u32[72,128]{1,0:T(1,128)}', space=vmem, size = 0x9000, scoped, tag = 'internal scratch']
  #allocation2 [shape = 'f32[8,16]{1,0:T(8,128)}', space=vmem, size = 0x1000, scoped, tag = 'scratch operand']
  %s0 = inlined_call_operand.vmem [shape: f32[8,16], index: 0, kind: input, shape index: {}]
  %s1 = inlined_call_operand.vmem [shape: s32[8,1], index: 1, kind: input, shape index: {}]
  %s2 = inlined_call_operand.hbm [shape: f32[8,128], index: 2, kind: output, shape index: {}]
  %s3 = sld [smem:[#allocation0]]
  $region26: #{tpu_custom_call.1} parent=0
    _
  %s5 = ssub.s32 1, %s3
  %s6 = scalar_select 0, %s5, %s3
  $region1: #{tpu_custom_call.1} parent=0
    #allocation3 [shape = 'u8[4096]{0}', space=vmem, size = 0x1000, scoped, tag = 'output window, operand 0, single buffered']
    #allocation4 [shape = 's32[1]{0}', space=sflag, size = 0x4, scoped, tag = 'scoped memory for tpu_custom_call.1']
    %7 = vsyncpa [#allocation4], 0
    // Predicated region
    $region2: #{tpu_custom_call.1} parent=1 // pred_check
      _
    $region3: #{tpu_custom_call.1} parent=1 // pred_check_branch
      %9 = sbr.rel (0) target = $region5
    $region4: #{tpu_custom_call.1} parent=1 // pred_region
      %s10 = sadd.s32 0, 0
      %p11 = scmp.lt.s32.totalorder %s10, 0
      %s12 = scalar_select %p11, %s10, 0
      %s13 = smul.addr %s12, 8
      %s14 = scalar_lea.vmem %s0, %s13
      %s15 = sadd.s32 0, 0
    $region5: #{tpu_custom_call.1} parent=1 // pred_fallthru
      _
    // Predicated region
    $region6: #{tpu_custom_call.1} parent=1 // pred_check
      _
    $region7: #{tpu_custom_call.1} parent=1 // pred_check_branch
      %17 = sbr.rel (0) target = $region9
    $region8: #{tpu_custom_call.1} parent=1 // pred_region
      %s18 = sadd.s32 0, 0
      %p19 = scmp.lt.s32.totalorder %s18, 0
      %s20 = scalar_select %p19, %s18, 0
      %s21 = smul.addr %s20, 8
      %s22 = scalar_lea.vmem %s1, %s21
      %s23 = sadd.s32 0, 0
    $region9: #{tpu_custom_call.1} parent=1 // pred_fallthru
      _
    %s24 = sadd.s32 0, 0
    %p25 = scmp.lt.s32.totalorder %s24, 0
    %s26 = scalar_select %p25, %s24, 0
    %s27 = smul.addr %s26, 8
    %s28 = scalar_lea.vmem %s0, %s27
    %s29 = sadd.s32 0, 0
    %p30 = scmp.lt.s32.totalorder %s29, 0
    %s31 = scalar_select %p30, %s29, 0
    %s32 = smul.addr %s31, 8
    %s33 = scalar_lea.vmem %s1, %s32
    %s34 = sadd.s32 0, 0
    %p35 = scmp.lt.s32.totalorder %s34, 0
    %s36 = scalar_select %p35, %s34, 0
    %s37 = smul.addr %s36, 8
    %s38 = scalar_lea.vmem %s0, %s37
    %s39 = sadd.s32 0, 0
    %s40 = sadd.s32 0, 0
    %p41 = scmp.lt.s32.totalorder %s40, 0
    %s42 = scalar_select %p41, %s40, 0
    %s43 = smul.addr %s42, 8
    %s44 = scalar_lea.vmem %s1, %s43
    %s45 = sadd.s32 0, 0
    %p46 = scmp.eq.s32.totalorder 0, 0
    // Predicated region
    $region10: #{tpu_custom_call.1} parent=1 // pred_check
      %p47 = pneg %p46
    $region11: #{tpu_custom_call.1} parent=1 // pred_check_branch
      %49 = sbr.rel (%p47) target = $region13
    $region12: #{tpu_custom_call.1} parent=1 // pred_region
      %vm50 = vcmask 130048
      %51 = vst.msk [vmem:[#allocation2] sm:$0xff] %vm50, 0.0
    $region13: #{tpu_custom_call.1} parent=1 // pred_fallthru
      _
    %v52 = vld [vmem:[%s38] sm:$0xff]
    %v53 = vld [vmem:[%s44] sm:$0xff]
    %v54 = vlaneseq
    %v55 = vand.u32 %v54, 127
    %56 = vset.pattern.permute.xlu0 0
    %57 = vperm.xlu0 %56, %v53
    %v58 = vpop.permute.xlu0 %57
    %vm59 = vcmp.eq.s32.totalorder %v55, %v58
    %v60 = vsel %vm59, 0.90625, 0.00625
    %v61 = vmax.f32 %v52, 0.0
    %v62 = vmul.f32 %v52, %v60
    %v63 = vsub.f32 %v61, %v62
    %v64 = vand.u32 2147483647, %v52
    %v65 = vsub.f32 0.0, %v64
    %v66 = vmul.f32 %v65, 1.442695
    %v67 = vpow.pop %v66
    %v68 = vadd.f32 %v67, 1.0
    %v69 = vlog2.pop %v68
    %v70 = vmul.f32 %v69, 0.6931472
    %v71 = vmul.f32 -0.5, %v67
    %v72 = vadd.f32 %v71, 1.0
    %v73 = vmul.f32 %v72, %v67
    %v74 = vand.u32 2147483647, %v67
    %vm75 = vcmp.lt.f32.partialorder %v74, 0.0004427343
    %v76 = vsel %vm75, %v73, %v70
    %v77 = vadd.f32 %v63, %v76
    %v78 = vld [vmem:[#allocation2] sm:$0xff]
    %v79 = vadd.f32 %v78, %v77
    %vm80 = vcmask 130048
    %81 = vst.msk [vmem:[#allocation2] sm:$0xff] %vm80, %v79
    // Predicated region
    $region14: #{tpu_custom_call.1} parent=1 // pred_check
      %p82 = pneg %p46
    $region15: #{tpu_custom_call.1} parent=1 // pred_check_branch
      %84 = sbr.rel (%p82) target = $region17
    $region16: #{tpu_custom_call.1} parent=1 // pred_region
      %v85 = vld [vmem:[#allocation2] sm:$0xff]
      %v86 = vsel %vm80, %v85, 0.0
      %87 = vadd.xlane.f32.xlu0 %v86
      %v88 = vpop.xlane.xlu0 %87
      %v89 = vrot.slane %v88, 4
      %v90 = vadd.f32 %v88, %v89
      %v91 = vrot.slane %v90, 2
      %v92 = vadd.f32 %v90, %v91
      %v93 = vrot.slane %v92, 1
      %v94 = vadd.f32 %v92, %v93
      %s95 = vtos %v94
      %v96 = vstv %s95
      %97 = vst [vmem:[#allocation3] sm:$0xff] %v96
    $region17: #{tpu_custom_call.1} parent=1 // pred_fallthru
      _
    // Predicated region
    $region18: #{tpu_custom_call.1} parent=1 // pred_check
      _
    $region19: #{tpu_custom_call.1} parent=1 // pred_check_branch
      %99 = sbr.rel (0) target = $region21
    $region20: #{tpu_custom_call.1} parent=1 // pred_region
      %101 = vsyncadd [#allocation4], 0
      %s103 = sshll.u32 [#allocation3], 4
      %s104 = int_to_ptr.vmem [resolvable:$true] %s103
      %s105 = sshll.u32 %s2, 4
      %s106 = int_to_ptr.hbm [resolvable:$true] %s105
      %108 = dma.vmem_to_hbm [thread:$0]  %s104, 128, %s106, [#allocation4]
    $region21: #{tpu_custom_call.1} parent=1 // pred_fallthru
      _
    // Predicated region
    $region22: #{tpu_custom_call.1} parent=1 // pred_check
      _
    $region23: #{tpu_custom_call.1} parent=1 // pred_check_branch
      %110 = sbr.rel (0) target = $region25
    $region24: #{tpu_custom_call.1} parent=1 // pred_region
      %112 = dma.done [#allocation4], 128
    $region25: #{tpu_custom_call.1} parent=1 // pred_fallthru
      _
    %113 = vsyncpa [#allocation4], 1

</llo_original>
